<compile_context>
chip_gen: v5e
topology: v5e:2x2
jax: 0.10.0
libtpu: 0.0.40
codegen_flags: <defaults>
</compile_context>

<pallas_src>
import functools

import jax
import jax.numpy as jnp
from jax.experimental import pallas as pl
from jax.experimental.pallas import tpu as pltpu


def _dice_kernel(x_ref, t_ref, inter_out_ref, denom_out_ref,
                 inter_ref, denom_ref,
                 *, apply_softmax, hw, tile_p, ragged, target_is_one_hot):
    # x_ref, t_ref     : (C, tile_p)  logits / target tile (native dtype)
    # inter_out_ref    : (C, 1)       per-batch sum(score * target)
    # denom_out_ref    : (C, 1)       per-batch sum(score^2) + sum(target^2)
    # scratch          : (C, tile_p)  lane-dense running sums (f32)
    j = pl.program_id(1)
    last_j = pl.num_programs(1) - 1

    @pl.when(j == 0)
    def _():
        inter_ref[...] = jnp.zeros_like(inter_ref)
        denom_ref[...] = jnp.zeros_like(denom_ref)

    x = x_ref[...].astype(jnp.float32)          # (C, tile_p)
    t = t_ref[...].astype(jnp.float32)          # (C, tile_p)

    if apply_softmax:
        # Softmax over the channel (sublane) axis, independently per pixel.
        # One exact reciprocal of the (1, tile_p) row + broadcast multiply
        # (cheaper than a (C, tile_p) divide for larger C; exact 1/x keeps
        # the 1e-5 tolerance).
        m = jnp.max(x, axis=0, keepdims=True)
        e = jnp.exp(x - m)
        s = e * (1.0 / jnp.sum(e, axis=0, keepdims=True))
    else:
        s = x

    def _accumulate(s_v, t_v):
        # Lane-dense accumulation: pure VPU adds, no per-step cross-lane
        # reduce.  zsum/ysum merged into a single denominator accumulator.
        inter_ref[...] += s_v * t_v
        if target_is_one_hot:
            denom_ref[...] += s_v * s_v + t_v        # t^2 == t for 0/1 targets
        else:
            denom_ref[...] += s_v * s_v + t_v * t_v

    if ragged:
        # Only the final (partial) spatial tile pays for masking; the
        # steady-state path is unmasked.
        @pl.when(j != last_j)
        def _():
            _accumulate(s, t)

        @pl.when(j == last_j)
        def _():
            lane = jax.lax.broadcasted_iota(jnp.int32, s.shape, 1)
            valid = lane < (hw - j * tile_p)
            # Mask s and t (2 selects); jnp.where also kills any NaN/Inf the
            # softmax produced on padded garbage lanes.
            _accumulate(jnp.where(valid, s, 0.0), jnp.where(valid, t, 0.0))
    else:
        _accumulate(s, t)

    @pl.when(j == last_j)
    def _():
        inter_out_ref[...] = jnp.sum(inter_ref[...], axis=1, keepdims=True)
        denom_out_ref[...] = jnp.sum(denom_ref[...], axis=1, keepdims=True)


def _round_up(x, m):
    return -(-x // m) * m


def _padded_rows(c, dtype):
    # Sublane padding of the second-to-last dim: 8 rows for 4-byte dtypes,
    # 16 for 2-byte, 32 for 1-byte.
    itemsize = jnp.dtype(dtype).itemsize
    return _round_up(c, max(8, 32 // itemsize))


def dice_loss(inputs, target, weight=None, softmax=True,
              target_is_one_hot=False,
              vmem_budget_bytes=8 * 1024 * 1024, max_tile_p=32768):
    """Pallas equivalent of DiceLoss.forward.

    inputs: (N, C, H, W) logits (any float dtype)
    target: (N, C, H, W) one-hot target (any float dtype) — matches the
            `target[:, i]` usage of the reference module.
    """
    N, C, H, W = inputs.shape
    assert target.shape == inputs.shape
    HW = H * W

    # Free, contiguous reshape (no HBM transpose/copy); native dtypes kept.
    x = jnp.reshape(inputs, (N, C, HW))
    t = jnp.reshape(target, (N, C, HW))

    # Tile width from a conservative VMEM budget.  Per lane we hold 2 pipeline
    # buffers for each input + 2 f32 full-width accumulators, all counted with
    # the sublane-PADDED channel count so raising the budget can't silently
    # exceed the scoped VMEM limit (tightest on v7x: 32 MiB scoped / 64 MiB).
    per_lane = (_padded_rows(C, x.dtype) * 2 * x.dtype.itemsize
                + _padded_rows(C, t.dtype) * 2 * t.dtype.itemsize
                + _padded_rows(C, jnp.float32) * 2 * 4)
    tp = vmem_budget_bytes // per_lane
    tp = max(128, (tp // 128) * 128)
    tp = int(min(tp, _round_up(HW, 128), max_tile_p))

    num_tiles = -(-HW // tp)
    ragged = (HW % tp) != 0

    kernel = functools.partial(
        _dice_kernel, apply_softmax=softmax, hw=HW, tile_p=tp,
        ragged=ragged, target_is_one_hot=target_is_one_hot)

    inter, denom = pl.pallas_call(
        kernel,
        out_shape=(jax.ShapeDtypeStruct((N, C, 1), jnp.float32),
                   jax.ShapeDtypeStruct((N, C, 1), jnp.float32)),
        grid_spec=pltpu.PrefetchScalarGridSpec(
            num_scalar_prefetch=0,
            grid=(N, num_tiles),
            in_specs=[
                # Leading batch dim squeezed out of the kernel view.
                pl.BlockSpec((None, C, tp), lambda n, j: (n, 0, j)),  # logits
                pl.BlockSpec((None, C, tp), lambda n, j: (n, 0, j)),  # target
            ],
            out_specs=[
                pl.BlockSpec((None, C, 1), lambda n, j: (n, 0, 0)),   # inter
                pl.BlockSpec((None, C, 1), lambda n, j: (n, 0, 0)),   # denom
            ],
            scratch_shapes=[
                pltpu.VMEM((C, tp), jnp.float32),   # intersect partials
                pltpu.VMEM((C, tp), jnp.float32),   # score^2 + target^2 partials
            ],
        ),
        compiler_params=pltpu.CompilerParams(
            # N is independent (per-batch partial outputs) => "parallel" so
            # v7x can shard it across both TensorCores; the spatial sweep is
            # the reduction ("arbitrary") axis.
            dimension_semantics=("parallel", "arbitrary")),
    )(x, t)

    # Finish dice / weighting / mean in the wrapper (tiny (N, C) math).
    smooth = 1e-05
    inter_c = jnp.sum(inter[..., 0], axis=0)    # (C,)
    denom_c = jnp.sum(denom[..., 0], axis=0)    # (C,)
    dice = 1.0 - (2.0 * inter_c + smooth) / (denom_c + smooth)
    if weight is None:
        w = jnp.ones((C,), jnp.float32)
    else:
        w = jnp.asarray(weight, jnp.float32).reshape(C)
    return jnp.sum(dice * w) / C


def _reference_dice_loss(inputs, target, weight=None, softmax=True):
    C = inputs.shape[1]
    s = jax.nn.softmax(inputs.astype(jnp.float32), axis=1) if softmax \
        else inputs.astype(jnp.float32)
    t = target.astype(jnp.float32)
    if weight is None:
        weight = [1.0] * C
    w = jnp.asarray(weight, jnp.float32)
    smooth = 1e-05
    inter = jnp.sum(s * t, axis=(0, 2, 3))
    zsum = jnp.sum(s * s, axis=(0, 2, 3))
    ysum = jnp.sum(t * t, axis=(0, 2, 3))
    dice = 1.0 - (2.0 * inter + smooth) / (zsum + ysum + smooth)
    return jnp.sum(dice * w) / C


if __name__ == "__main__":
    key = jax.random.PRNGKey(0)
    k1, k2, k3, k4, k5, k6 = jax.random.split(key, 6)

    # Case 1: aligned spatial size, no weights, single tile per batch element.
    N, C, H, W = 2, 4, 16, 16
    inputs = jax.random.normal(k1, (N, C, H, W), dtype=jnp.float32)
    labels = jax.random.randint(k2, (N, H, W), 0, C)
    target = jax.nn.one_hot(labels, C, axis=1, dtype=jnp.float32)  # (N,C,H,W)

    loss = jax.block_until_ready(dice_loss(inputs, target, softmax=True))
    ref = _reference_dice_loss(inputs, target, softmax=True)
    assert jnp.allclose(loss, ref, atol=1e-5, rtol=1e-5), (loss, ref)

    # Case 2: ragged spatial size (masked last tile), class weights,
    #         bf16 one-hot target passed in its native dtype.
    N2, C2, H2, W2 = 1, 4, 10, 10
    inputs2 = jax.random.normal(k3, (N2, C2, H2, W2), dtype=jnp.float32)
    labels2 = jax.random.randint(k4, (N2, H2, W2), 0, C2)
    target2 = jax.nn.one_hot(labels2, C2, axis=1, dtype=jnp.bfloat16)
    wts = [0.5, 1.0, 1.5, 2.0]

    loss2 = jax.block_until_ready(
        dice_loss(inputs2, target2, weight=wts, softmax=True))
    ref2 = _reference_dice_loss(inputs2, target2, weight=wts, softmax=True)
    assert jnp.allclose(loss2, ref2, atol=1e-5, rtol=1e-5), (loss2, ref2)

    # Case 3: multi-tile ragged spatial sweep (exercises both the unmasked
    #         steady-state path and the masked final tile) + one-hot fast
    #         path + class weights.
    N3, C3, H3, W3 = 2, 4, 30, 30
    inputs3 = jax.random.normal(k5, (N3, C3, H3, W3), dtype=jnp.float32)
    labels3 = jax.random.randint(k6, (N3, H3, W3), 0, C3)
    target3 = jax.nn.one_hot(labels3, C3, axis=1, dtype=jnp.float32)

    loss3 = jax.block_until_ready(
        dice_loss(inputs3, target3, weight=wts, softmax=True,
                  target_is_one_hot=True, max_tile_p=256))
    ref3 = _reference_dice_loss(inputs3, target3, weight=wts, softmax=True)
    assert jnp.allclose(loss3, ref3, atol=1e-5, rtol=1e-5), (loss3, ref3)

    print("KERNEL_OK")
</pallas_src>

<mosaic_0001>
module attributes {stable_mosaic.version = 11 : i64} {
  func.func @_dice_kernel(%arg0: i32, %arg1: i32, %arg2: memref<1x4x256xf32, #tpu.memory_space<vmem>>, %arg3: memref<1x4x256xf32, #tpu.memory_space<vmem>>, %arg4: memref<1x4x1xf32, #tpu.memory_space<vmem>>, %arg5: memref<1x4x1xf32, #tpu.memory_space<vmem>>, %arg6: memref<4x256xf32, #tpu.memory_space<vmem>>, %arg7: memref<4x256xf32, #tpu.memory_space<vmem>>) attributes {dimension_semantics = [#tpu.dimension_semantics<parallel>, #tpu.dimension_semantics<arbitrary>], iteration_bounds = array<i64: 2, 1>, scalar_prefetch = 0 : i64, scratch_operands = 2 : i64, tpu.core_type = #tpu.core_type<tc>, window_params = [{transform_indices = @transform_0, window_bounds = array<i64: 1, 4, 256>}, {transform_indices = @transform_1, window_bounds = array<i64: 1, 4, 256>}, {transform_indices = @transform_2, window_bounds = array<i64: 1, 4, 1>}, {transform_indices = @transform_3, window_bounds = array<i64: 1, 4, 1>}]} {
    %c0_i32 = arith.constant 0 : i32
    %0 = arith.cmpi eq, %arg1, %c0_i32 : i32
    %1 = arith.extui %0 : i1 to i32
    %c0_i32_0 = arith.constant 0 : i32
    %2 = arith.cmpi ne, %1, %c0_i32_0 : i32
    scf.if %2 {
      %cst_18 = arith.constant 0.000000e+00 : f32
      %31 = vector.broadcast %cst_18 : f32 to vector<4x256xf32>
      %c0_19 = arith.constant 0 : index
      %c0_20 = arith.constant 0 : index
      %32 = vector.load %arg6[%c0_19, %c0_20] : memref<4x256xf32, #tpu.memory_space<vmem>>, vector<4x256xf32>
      tpu.vector_store %arg6[%c0_19, %c0_20], %31 {strides = array<i32>} : memref<4x256xf32, #tpu.memory_space<vmem>>, vector<4x256xf32>,
      %cst_21 = arith.constant 0.000000e+00 : f32
      %33 = vector.broadcast %cst_21 : f32 to vector<4x256xf32>
      %c0_22 = arith.constant 0 : index
      %c0_23 = arith.constant 0 : index
      %34 = vector.load %arg7[%c0_22, %c0_23] : memref<4x256xf32, #tpu.memory_space<vmem>>, vector<4x256xf32>
      tpu.vector_store %arg7[%c0_22, %c0_23], %33 {strides = array<i32>} : memref<4x256xf32, #tpu.memory_space<vmem>>, vector<4x256xf32>,
    } else {
    }
    %c0 = arith.constant 0 : index
    %c0_1 = arith.constant 0 : index
    %c0_2 = arith.constant 0 : index
    %3 = vector.load %arg2[%c0, %c0_1, %c0_2] : memref<1x4x256xf32, #tpu.memory_space<vmem>>, vector<1x4x256xf32>
    %4 = vector.shape_cast %3 : vector<1x4x256xf32> to vector<4x256xf32>
    %c0_3 = arith.constant 0 : index
    %c0_4 = arith.constant 0 : index
    %c0_5 = arith.constant 0 : index
    %5 = vector.load %arg3[%c0_3, %c0_4, %c0_5] : memref<1x4x256xf32, #tpu.memory_space<vmem>>, vector<1x4x256xf32>
    %6 = vector.shape_cast %5 : vector<1x4x256xf32> to vector<4x256xf32>
    %cst = arith.constant dense<0xFF800000> : vector<256xf32>
    %7 = vector.multi_reduction <maximumf>, %4, %cst [0] : vector<4x256xf32> to vector<256xf32>
    %8 = vector.shape_cast %7 : vector<256xf32> to vector<1x256xf32>
    %9 = vector.broadcast %8 : vector<1x256xf32> to vector<4x256xf32>
    %10 = arith.subf %4, %9 : vector<4x256xf32>
    %11 = math.exp %10 : vector<4x256xf32>
    %cst_6 = arith.constant dense<0.000000e+00> : vector<256xf32>
    %12 = vector.multi_reduction <add>, %11, %cst_6 [0] : vector<4x256xf32> to vector<256xf32>
    %13 = vector.shape_cast %12 : vector<256xf32> to vector<1x256xf32>
    %cst_7 = arith.constant 1.000000e+00 : f32
    %14 = vector.broadcast %cst_7 : f32 to vector<1x256xf32>
    %15 = arith.divf %14, %13 : vector<1x256xf32>
    %16 = vector.broadcast %15 : vector<1x256xf32> to vector<4x256xf32>
    %17 = arith.mulf %11, %16 : vector<4x256xf32>
    %c0_8 = arith.constant 0 : index
    %c0_9 = arith.constant 0 : index
    %18 = vector.load %arg6[%c0_8, %c0_9] : memref<4x256xf32, #tpu.memory_space<vmem>>, vector<4x256xf32>
    %19 = arith.mulf %17, %6 : vector<4x256xf32>
    %20 = arith.addf %18, %19 : vector<4x256xf32>
    %c0_10 = arith.constant 0 : index
    %c0_11 = arith.constant 0 : index
    %21 = vector.load %arg6[%c0_10, %c0_11] : memref<4x256xf32, #tpu.memory_space<vmem>>, vector<4x256xf32>
    tpu.vector_store %arg6[%c0_10, %c0_11], %20 {strides = array<i32>} : memref<4x256xf32, #tpu.memory_space<vmem>>, vector<4x256xf32>,
    %c0_12 = arith.constant 0 : index
    %c0_13 = arith.constant 0 : index
    %22 = vector.load %arg7[%c0_12, %c0_13] : memref<4x256xf32, #tpu.memory_space<vmem>>, vector<4x256xf32>
    %23 = arith.mulf %17, %17 : vector<4x256xf32>
    %24 = arith.mulf %6, %6 : vector<4x256xf32>
    %25 = arith.addf %23, %24 : vector<4x256xf32>
    %26 = arith.addf %22, %25 : vector<4x256xf32>
    %c0_14 = arith.constant 0 : index
    %c0_15 = arith.constant 0 : index
    %27 = vector.load %arg7[%c0_14, %c0_15] : memref<4x256xf32, #tpu.memory_space<vmem>>, vector<4x256xf32>
    tpu.vector_store %arg7[%c0_14, %c0_15], %26 {strides = array<i32>} : memref<4x256xf32, #tpu.memory_space<vmem>>, vector<4x256xf32>,
    %c0_i32_16 = arith.constant 0 : i32
    %28 = arith.cmpi eq, %arg1, %c0_i32_16 : i32
    %29 = arith.extui %28 : i1 to i32
    %c0_i32_17 = arith.constant 0 : i32
    %30 = arith.cmpi ne, %29, %c0_i32_17 : i32
    scf.if %30 {
      %c0_18 = arith.constant 0 : index
      %c0_19 = arith.constant 0 : index
      %31 = vector.load %arg6[%c0_18, %c0_19] : memref<4x256xf32, #tpu.memory_space<vmem>>, vector<4x256xf32>
      %cst_20 = arith.constant dense<0.000000e+00> : vector<4xf32>
      %32 = vector.multi_reduction <add>, %31, %cst_20 [1] : vector<4x256xf32> to vector<4xf32>
      %33 = vector.shape_cast %32 : vector<4xf32> to vector<4x1xf32>
      %c0_21 = arith.constant 0 : index
      %c0_22 = arith.constant 0 : index
      %c0_23 = arith.constant 0 : index
      %34 = vector.load %arg4[%c0_21, %c0_22, %c0_23] : memref<1x4x1xf32, #tpu.memory_space<vmem>>, vector<1x4x1xf32>
      %35 = vector.shape_cast %34 : vector<1x4x1xf32> to vector<4x1xf32>
      %36 = vector.shape_cast %33 : vector<4x1xf32> to vector<1x4x1xf32>
      tpu.vector_store %arg4[%c0_21, %c0_22, %c0_23], %36 {strides = array<i32>} : memref<1x4x1xf32, #tpu.memory_space<vmem>>, vector<1x4x1xf32>,
      %c0_24 = arith.constant 0 : index
      %c0_25 = arith.constant 0 : index
      %37 = vector.load %arg7[%c0_24, %c0_25] : memref<4x256xf32, #tpu.memory_space<vmem>>, vector<4x256xf32>
      %cst_26 = arith.constant dense<0.000000e+00> : vector<4xf32>
      %38 = vector.multi_reduction <add>, %37, %cst_26 [1] : vector<4x256xf32> to vector<4xf32>
      %39 = vector.shape_cast %38 : vector<4xf32> to vector<4x1xf32>
      %c0_27 = arith.constant 0 : index
      %c0_28 = arith.constant 0 : index
      %c0_29 = arith.constant 0 : index
      %40 = vector.load %arg5[%c0_27, %c0_28, %c0_29] : memref<1x4x1xf32, #tpu.memory_space<vmem>>, vector<1x4x1xf32>
      %41 = vector.shape_cast %40 : vector<1x4x1xf32> to vector<4x1xf32>
      %42 = vector.shape_cast %39 : vector<4x1xf32> to vector<1x4x1xf32>
      tpu.vector_store %arg5[%c0_27, %c0_28, %c0_29], %42 {strides = array<i32>} : memref<1x4x1xf32, #tpu.memory_space<vmem>>, vector<1x4x1xf32>,
    } else {
    }
    return
  }
  func.func @transform_0(%arg0: i32, %arg1: i32) -> (i32, i32, i32) {
    %c0_i32 = arith.constant 0 : i32
    %c0_i32_0 = arith.constant 0 : i32
    return %arg0, %c0_i32, %arg1 : i32, i32, i32
  }
  func.func @transform_1(%arg0: i32, %arg1: i32) -> (i32, i32, i32) {
    %c0_i32 = arith.constant 0 : i32
    %c0_i32_0 = arith.constant 0 : i32
    return %arg0, %c0_i32, %arg1 : i32, i32, i32
  }
  func.func @transform_2(%arg0: i32, %arg1: i32) -> (i32, i32, i32) {
    %c0_i32 = arith.constant 0 : i32
    %c0_i32_0 = arith.constant 0 : i32
    %c0_i32_1 = arith.constant 0 : i32
    return %arg0, %c0_i32, %c0_i32_0 : i32, i32, i32
  }
  func.func @transform_3(%arg0: i32, %arg1: i32) -> (i32, i32, i32) {
    %c0_i32 = arith.constant 0 : i32
    %c0_i32_0 = arith.constant 0 : i32
    %c0_i32_1 = arith.constant 0 : i32
    return %arg0, %c0_i32, %c0_i32_0 : i32, i32, i32
  }
}

</mosaic_0001>

<llo_original>
// kernel: tpu_custom_call.1
$region0: #{tpu_custom_call.1}
  #allocation0 [shape = 'u32[]', space=smem, size = 0x4, offset = 0x4, fixed_abs, tag = 'smem constant byte address 0x4 - core index']
  #allocation1 [shape = 'u32[72,128]{1,0:T(1,128)}', space=vmem, size = 0x9000, scoped, tag = 'internal scratch']
  #allocation2 [shape = 'f32[4,256]{1,0:T(4,128)}', space=vmem, size = 0x1000, scoped, tag = 'scratch operand']
  #allocation3 [shape = 'f32[4,256]{1,0:T(4,128)}', space=vmem, size = 0x1000, scoped, tag = 'scratch operand']
  %s0 = inlined_call_operand.hbm [shape: f32[2,4,256], index: 0, kind: input, shape index: {}]
  %s1 = inlined_call_operand.hbm [shape: f32[2,4,256], index: 1, kind: input, shape index: {}]
  %s2 = inlined_call_operand.vmem [shape: f32[2,4,1], index: 2, kind: output, shape index: {0}]
  %s3 = inlined_call_operand.vmem [shape: f32[2,4,1], index: 3, kind: output, shape index: {1}]
  %4 = xla_tuple %s2, %s3
  %s5 = sld [smem:[#allocation0]]
  $region65: #{tpu_custom_call.1} parent=0
    _
  %s7 = ssub.s32 1, %s5
  %s8 = scalar_select 0, %s7, %s5
  $region1: #{tpu_custom_call.1} parent=0
    #allocation4 [shape = 'u8[8192]{0}', space=vmem, size = 0x2000, scoped, tag = 'input window, operand 0']
    #allocation5 [shape = 's32[2]{0}', space=sflag, size = 0x8, scoped, tag = 'scoped memory for tpu_custom_call.1']
    #allocation6 [shape = 'u8[8192]{0}', space=vmem, size = 0x2000, scoped, tag = 'input window, operand 1']
    #allocation7 [shape = 's32[2]{0}', space=sflag, size = 0x8, scoped, tag = 'scoped memory for tpu_custom_call.1']
    %9 = vsyncpa [#allocation5], 0
    %s10 = scalar_lea.sflag [#allocation5], 1
    %11 = vsyncpa %s10, 0
    %12 = vsyncpa [#allocation7], 0
    %s13 = scalar_lea.sflag [#allocation7], 1
    %14 = vsyncpa %s13, 0
    loop: start=0, step=1, limit=4
    $region2: #{tpu_custom_call.1} parent=1 // loop_pre_header
      _
    $region3: #{tpu_custom_call.1} parent=1 // loop_header
      %s16 = sphi 0, %s20
      %p17 = scmp.ge.s32.totalorder %s16, 4
      %s23 = sphi 0, %s35
      %s24 = sphi 0, %s31
      %s25 = sphi 0, %s23
      %s26 = sphi 0, %s24
      %s27 = sphi 0, %s25
      %s28 = sphi 0, %s26
      %s40 = sphi 0, %s42
      %s43 = sphi 0, %s40
      %s44 = sphi 0, %s43
      %s60 = sphi 0, %s44
      %s68 = sphi 0, %s70
      %s71 = sphi 0, %s68
      %s72 = sphi 0, %s71
      %s88 = sphi 0, %s72
      %s94 = sphi 0, %s96
      %s97 = sphi 0, %s94
      %s98 = sphi 0, %s97
      %s114 = sphi 0, %s98
      %s120 = sphi 0, %s122
      %s123 = sphi 0, %s120
      %s124 = sphi 0, %s123
      %s140 = sphi 0, %s124
    $region4: #{tpu_custom_call.1} parent=1 // loop_header_branch
      %19 = sbr.rel (%p17) target = $region8
    $region5: #{tpu_custom_call.1} parent=1 // loop_body
      %s21 = ssub.s32 %s16, 1
      %s22 = ssub.s32 %s16, 2
      %s29 = sadd.s32 1, %s24
      %p30 = scmp.ge.s32.totalorder %s29, 1
      %s31 = scalar_select %p30, 0, %s29
      %s32 = sadd.s32 1, %s23
      %s33 = scalar_select %p30, %s32, %s23
      %p34 = scmp.ge.s32.totalorder %s33, 2
      %s35 = scalar_select %p34, 0, %s33
      %s36 = ssub.s32 %s23, %s35
      %s37 = ssub.s32 %s24, %s31
      %s38 = sor.u32 %s36, %s37
      %p39 = scmp.eq.s32.totalorder %s38, 0
      %s41 = sadd.s32 %s40, 1
      %s42 = scalar_select %p39, %s40, %s41
      %p45 = pneg %p39
      %p46 = scmp.eq.s32.totalorder %s16, 1
      %p47 = por %p45, %p46
      %p48 = scmp.ne.s32.totalorder %s40, %s43
      %p49 = scmp.eq.s32.totalorder %s16, 0
      %p50 = por %p48, %p49
      %p51 = scmp.ne.s32.totalorder %s40, %s43
      %p52 = scmp.eq.s32.totalorder %s21, 1
      %p53 = por %p51, %p52
      %p54 = scmp.ne.s32.totalorder %s43, %s44
      %p55 = scmp.eq.s32.totalorder %s21, 0
      %p56 = por %p54, %p55
      %p57 = scmp.ne.s32.totalorder %s43, %s44
      %p58 = scmp.eq.s32.totalorder %s22, 1
      %p59 = por %p57, %p58
      %p61 = scmp.ne.s32.totalorder %s44, %s60
      %p62 = scmp.eq.s32.totalorder %s22, 0
      %p63 = por %p61, %p62
      %s64 = ssub.s32 %s23, %s35
      %s65 = ssub.s32 %s24, %s31
      %s66 = sor.u32 %s64, %s65
      %p67 = scmp.eq.s32.totalorder %s66, 0
      %s69 = sadd.s32 %s68, 1
      %s70 = scalar_select %p67, %s68, %s69
      %p73 = pneg %p67
      %p74 = scmp.eq.s32.totalorder %s16, 1
      %p75 = por %p73, %p74
      %p76 = scmp.ne.s32.totalorder %s68, %s71
      %p77 = scmp.eq.s32.totalorder %s16, 0
      %p78 = por %p76, %p77
      %p79 = scmp.ne.s32.totalorder %s68, %s71
      %p80 = scmp.eq.s32.totalorder %s21, 1
      %p81 = por %p79, %p80
      %p82 = scmp.ne.s32.totalorder %s71, %s72
      %p83 = scmp.eq.s32.totalorder %s21, 0
      %p84 = por %p82, %p83
      %p85 = scmp.ne.s32.totalorder %s71, %s72
      %p86 = scmp.eq.s32.totalorder %s22, 1
      %p87 = por %p85, %p86
      %p89 = scmp.ne.s32.totalorder %s72, %s88
      %p90 = scmp.eq.s32.totalorder %s22, 0
      %p91 = por %p89, %p90
      %s92 = ssub.s32 %s23, %s35
      %p93 = scmp.eq.s32.totalorder %s92, 0
      %s95 = sadd.s32 %s94, 1
      %s96 = scalar_select %p93, %s94, %s95
      %p99 = pneg %p93
      %p100 = scmp.eq.s32.totalorder %s16, 1
      %p101 = por %p99, %p100
      %p102 = scmp.ne.s32.totalorder %s94, %s97
      %p103 = scmp.eq.s32.totalorder %s16, 0
      %p104 = por %p102, %p103
      %p105 = scmp.ne.s32.totalorder %s94, %s97
      %p106 = scmp.eq.s32.totalorder %s21, 1
      %p107 = por %p105, %p106
      %p108 = scmp.ne.s32.totalorder %s97, %s98
      %p109 = scmp.eq.s32.totalorder %s21, 0
      %p110 = por %p108, %p109
      %p111 = scmp.ne.s32.totalorder %s97, %s98
      %p112 = scmp.eq.s32.totalorder %s22, 1
      %p113 = por %p111, %p112
      %p115 = scmp.ne.s32.totalorder %s98, %s114
      %p116 = scmp.eq.s32.totalorder %s22, 0
      %p117 = por %p115, %p116
      %s118 = ssub.s32 %s23, %s35
      %p119 = scmp.eq.s32.totalorder %s118, 0
      %s121 = sadd.s32 %s120, 1
      %s122 = scalar_select %p119, %s120, %s121
      %p125 = pneg %p119
      %p126 = scmp.eq.s32.totalorder %s16, 1
      %p127 = por %p125, %p126
      %p128 = scmp.ne.s32.totalorder %s120, %s123
      %p129 = scmp.eq.s32.totalorder %s16, 0
      %p130 = por %p128, %p129
      %p131 = scmp.ne.s32.totalorder %s120, %s123
      %p132 = scmp.eq.s32.totalorder %s21, 1
      %p133 = por %p131, %p132
      %p134 = scmp.ne.s32.totalorder %s123, %s124
      %p135 = scmp.eq.s32.totalorder %s21, 0
      %p136 = por %p134, %p135
      %p137 = scmp.ne.s32.totalorder %s123, %s124
      %p138 = scmp.eq.s32.totalorder %s22, 1
      %p139 = por %p137, %p138
      %p141 = scmp.ne.s32.totalorder %s124, %s140
      %p142 = scmp.eq.s32.totalorder %s22, 0
      %p143 = por %p141, %p142
      %p144 = scmp.le.s32.totalorder 1, %s16
      %p145 = scmp.lt.s32.totalorder %s16, 3
      %p146 = pnand %p144, %p145
      %p147 = pneg %p146
      // Predicated region
      $region9: #{tpu_custom_call.1} parent=5 // pred_check
        _
      $region10: #{tpu_custom_call.1} parent=5 // pred_check_branch
        %149 = sbr.rel (%p146) target = $region12
      $region11: #{tpu_custom_call.1} parent=5 // pred_region
        %s150 = ssub.s32 %s16, 1
      $region12: #{tpu_custom_call.1} parent=5 // pred_fallthru
        _
      %p151 = scmp.lt.s32.totalorder %s16, 2
      // Predicated region
      $region13: #{tpu_custom_call.1} parent=5 // pred_check
        %p152 = pneg %p151
      $region14: #{tpu_custom_call.1} parent=5 // pred_check_branch
        %154 = sbr.rel (%p152) target = $region16
      $region15: #{tpu_custom_call.1} parent=5 // pred_region
        // Predicated region
        $region17: #{tpu_custom_call.1} parent=15 // pred_check
          %p155 = pneg %p50
        $region18: #{tpu_custom_call.1} parent=15 // pred_check_branch
          %157 = sbr.rel (%p155) target = $region20
        $region19: #{tpu_custom_call.1} parent=15 // pred_region
          %s158 = sand.u32 %s40, 1
          %s159 = scalar_lea.sflag [#allocation5], %s158
          %s160 = sand.u32 %s40, 1
          %s161 = smul.addr %s160, 8
          %s162 = scalar_lea.vmem [#allocation4], %s161
          %s163 = smul.u32 2, %s24
          %165 = vsyncadd %s159, 0
          %s166 = smul.addr %s23, 2
          %s167 = sadd.s32 %s163, %s166
          %s168 = smul.addr %s167, 4
          %s169 = scalar_lea.hbm %s0, %s168
          %s171 = sshll.u32 %s169, 4
          %s172 = int_to_ptr.hbm [resolvable:$true] %s171
          %s173 = sshll.u32 %s162, 4
          %s174 = int_to_ptr.vmem [resolvable:$true] %s173
          %176 = dma.hbm_to_vmem [thread:$0]  %s172, 128, %s174, %s159
        $region20: #{tpu_custom_call.1} parent=15 // pred_fallthru
          _
        // Predicated region
        $region21: #{tpu_custom_call.1} parent=15 // pred_check
          %p177 = pneg %p78
        $region22: #{tpu_custom_call.1} parent=15 // pred_check_branch
          %179 = sbr.rel (%p177) target = $region24
        $region23: #{tpu_custom_call.1} parent=15 // pred_region
          %s180 = sand.u32 %s68, 1
          %s181 = scalar_lea.sflag [#allocation7], %s180
          %s182 = sand.u32 %s68, 1
          %s183 = smul.addr %s182, 8
          %s184 = scalar_lea.vmem [#allocation6], %s183
          %s185 = smul.u32 2, %s24
          %187 = vsyncadd %s181, 0
          %s188 = smul.addr %s23, 2
          %s189 = sadd.s32 %s185, %s188
          %s190 = smul.addr %s189, 4
          %s191 = scalar_lea.hbm %s1, %s190
          %s193 = sshll.u32 %s191, 4
          %s194 = int_to_ptr.hbm [resolvable:$true] %s193
          %s195 = sshll.u32 %s184, 4
          %s196 = int_to_ptr.vmem [resolvable:$true] %s195
          %198 = dma.hbm_to_vmem [thread:$0]  %s194, 128, %s196, %s181
        $region24: #{tpu_custom_call.1} parent=15 // pred_fallthru
          _
      $region16: #{tpu_custom_call.1} parent=5 // pred_fallthru
        _
      %p199 = scmp.le.s32.totalorder 1, %s16
      %p200 = scmp.lt.s32.totalorder %s16, 3
      %p201 = pnand %p199, %p200
      %p202 = pneg %p201
      // Predicated region
      $region25: #{tpu_custom_call.1} parent=5 // pred_check
        _
      $region26: #{tpu_custom_call.1} parent=5 // pred_check_branch
        %204 = sbr.rel (%p201) target = $region28
      $region27: #{tpu_custom_call.1} parent=5 // pred_region
        %s205 = ssub.s32 %s16, 1
        %s206 = sand.u32 %s43, 1
        %s207 = scalar_lea.sflag [#allocation5], %s206
        %s208 = sand.u32 %s43, 1
        %s209 = smul.addr %s208, 8
        %s210 = scalar_lea.vmem [#allocation4], %s209
        // Predicated region
        $region29: #{tpu_custom_call.1} parent=27 // pred_check
          %p211 = pneg %p56
        $region30: #{tpu_custom_call.1} parent=27 // pred_check_branch
          %213 = sbr.rel (%p211) target = $region32
        $region31: #{tpu_custom_call.1} parent=27 // pred_region
          %215 = dma.done %s207, 128
        $region32: #{tpu_custom_call.1} parent=27 // pred_fallthru
          _
        %s216 = sand.u32 %s71, 1
        %s217 = scalar_lea.sflag [#allocation7], %s216
        %s218 = sand.u32 %s71, 1
        %s219 = smul.addr %s218, 8
        %s220 = scalar_lea.vmem [#allocation6], %s219
        // Predicated region
        $region33: #{tpu_custom_call.1} parent=27 // pred_check
          %p221 = pneg %p84
        $region34: #{tpu_custom_call.1} parent=27 // pred_check_branch
          %223 = sbr.rel (%p221) target = $region36
        $region35: #{tpu_custom_call.1} parent=27 // pred_region
          %225 = dma.done %s217, 128
        $region36: #{tpu_custom_call.1} parent=27 // pred_fallthru
          _
        %s226 = sand.u32 %s43, 1
        %s227 = scalar_lea.sflag [#allocation5], %s226
        %s228 = sand.u32 %s43, 1
        %s229 = smul.addr %s228, 8
        %s230 = scalar_lea.vmem [#allocation4], %s229
        %p231 = pneg %p56
        %p232 = pneg %p53
        %s233 = sand.u32 %s71, 1
        %s234 = scalar_lea.sflag [#allocation7], %s233
        %s235 = sand.u32 %s71, 1
        %s236 = smul.addr %s235, 8
        %s237 = scalar_lea.vmem [#allocation6], %s236
        %p238 = pneg %p84
        %p239 = pneg %p81
        %p240 = pneg %p110
        %p241 = pneg %p107
        %p242 = scmp.lt.s32.totalorder %s25, 1
        %s243 = scalar_select %p242, %s25, 1
        %s244 = smul.addr %s243, 4
        %s245 = scalar_lea.vmem %s2, %s244
        %p246 = pneg %p136
        %p247 = pneg %p133
        %p248 = scmp.lt.s32.totalorder %s25, 1
        %s249 = scalar_select %p248, %s25, 1
        %s250 = smul.addr %s249, 4
        %s251 = scalar_lea.vmem %s3, %s250
        %s252 = smul.u32 2, %s26
        %s253 = smul.u32 2, %s26
        %p254 = scmp.lt.s32.totalorder %s25, 1
        %s255 = scalar_select %p254, %s25, 1
        %s256 = smul.addr %s255, 4
        %s257 = scalar_lea.vmem %s2, %s256
        %p258 = scmp.lt.s32.totalorder %s25, 1
        %s259 = scalar_select %p258, %s25, 1
        %s260 = smul.addr %s259, 4
        %s261 = scalar_lea.vmem %s3, %s260
        %p262 = scmp.eq.s32.totalorder %s26, 0
        // Predicated region
        $region37: #{tpu_custom_call.1} parent=27 // pred_check
          %p263 = pneg %p262
        $region38: #{tpu_custom_call.1} parent=27 // pred_check_branch
          %265 = sbr.rel (%p263) target = $region40
        $region39: #{tpu_custom_call.1} parent=27 // pred_region
          %266 = vst [vmem:[#allocation2] sm:$0xff] 0.0
          %267 = vst [vmem:[#allocation3] sm:$0xff] 0.0
        $region40: #{tpu_custom_call.1} parent=27 // pred_fallthru
          _
        %v268 = vld [vmem:[%s210] sm:$0xff]
        %v269 = vld [vmem:[%s220] sm:$0xff]
        %271 = vst [vmem:[#allocation1] ss:$2 sm:$0xff] %v268
        %v272 = vld.sshfl [vmem:[#allocation1] sm:$0xff pattern:$0x75316420]
        %v273 = vld.sshfl [vmem:[#allocation1 + $0x8] sm:$0xff pattern:$0x75316420]
        %vm276 = vcmask 1043456
        %v277 = vsel %vm276, %v272, -inf
        %v278 = vrot.slane %v277, 4
        %v279 = vmax.f32 %v277, %v278
        %v280 = vrot.slane %v279, 2
        %v281 = vmax.f32 %v279, %v280
        %v282 = vrot.slane %v281, 1
        %v283 = vmax.f32 %v281, %v282
        %v284 = vsel %vm276, %v273, -inf
        %v285 = vrot.slane %v284, 4
        %v286 = vmax.f32 %v284, %v285
        %v287 = vrot.slane %v286, 2
        %v288 = vmax.f32 %v286, %v287
        %v289 = vrot.slane %v288, 1
        %v290 = vmax.f32 %v288, %v289
        %v293 = vrot.slane %v290, 4
        %v294 = vsel %vm276, %v283, %v293
        %v296 = vsub.f32 %v268, %v294
        %v297 = vmul.f32 %v296, 1.442695
        %v298 = vpow.pop %v297
        %300 = vst [vmem:[#allocation1] ss:$2 sm:$0xff] %v298
        %v301 = vld.sshfl [vmem:[#allocation1] sm:$0xff pattern:$0x75316420]
        %v302 = vld.sshfl [vmem:[#allocation1 + $0x8] sm:$0xff pattern:$0x75316420]
        %v305 = vsel %vm276, %v301, 0.0
        %v306 = vrot.slane %v305, 4
        %v307 = vadd.f32 %v305, %v306
        %v308 = vrot.slane %v307, 2
        %v309 = vadd.f32 %v307, %v308
        %v310 = vrot.slane %v309, 1
        %v311 = vadd.f32 %v309, %v310
        %v312 = vsel %vm276, %v302, 0.0
        %v313 = vrot.slane %v312, 4
        %v314 = vadd.f32 %v312, %v313
        %v315 = vrot.slane %v314, 2
        %v316 = vadd.f32 %v314, %v315
        %v317 = vrot.slane %v316, 1
        %v318 = vadd.f32 %v316, %v317
        %v319 = vrcp.pop %v311
        %v320 = vmul.f32 %v311, %v319
        %v321 = vsub.f32 1.0, %v320
        %v322 = vmul.f32 %v319, %v321
        %v323 = vadd.f32 %v319, %v322
        %vm324 = vweird.f32 %v311
        %vm325 = vweird.f32 %v319
        %vm326 = vmor %vm324, %vm325
        %v327 = vsel %vm326, %v319, %v323
        %v328 = vand.u32 2147483647, %v311
        %vm329 = vcmp.eq.f32.partialorder %v328, 8.507059e+37
        %v330 = vand.u32 %v311, 2147483648
        %v331 = vor.u32 1.1754944e-38, %v330
        %v332 = vsel %vm329, %v331, %v327
        %v333 = vmul.f32 1.0, %v332
        %v334 = vrcp.pop %v318
        %v335 = vmul.f32 %v318, %v334
        %v336 = vsub.f32 1.0, %v335
        %v337 = vmul.f32 %v334, %v336
        %v338 = vadd.f32 %v334, %v337
        %vm339 = vweird.f32 %v318
        %vm340 = vweird.f32 %v334
        %vm341 = vmor %vm339, %vm340
        %v342 = vsel %vm341, %v334, %v338
        %v343 = vand.u32 2147483647, %v318
        %vm344 = vcmp.eq.f32.partialorder %v343, 8.507059e+37
        %v345 = vand.u32 %v318, 2147483648
        %v346 = vor.u32 1.1754944e-38, %v345
        %v347 = vsel %vm344, %v346, %v342
        %v348 = vmul.f32 1.0, %v347
        %v351 = vrot.slane %v348, 4
        %v352 = vsel %vm276, %v333, %v351
        %v354 = vmul.f32 %v298, %v352
        %v355 = vld [vmem:[#allocation2] sm:$0xff]
        %v356 = vmul.f32 %v354, %v269
        %v357 = vadd.f32 %v355, %v356
        %358 = vst [vmem:[#allocation2] sm:$0xff] %v357
        %v359 = vld [vmem:[#allocation3] sm:$0xff]
        %v360 = vmul.f32 %v354, %v354
        %v361 = vmul.f32 %v269, %v269
        %v362 = vadd.f32 %v360, %v361
        %v363 = vadd.f32 %v359, %v362
        %364 = vst [vmem:[#allocation3] sm:$0xff] %v363
        // Predicated region
        $region41: #{tpu_custom_call.1} parent=27 // pred_check
          %p365 = pneg %p262
        $region42: #{tpu_custom_call.1} parent=27 // pred_check_branch
          %367 = sbr.rel (%p365) target = $region44
        $region43: #{tpu_custom_call.1} parent=27 // pred_region
          %v368 = vld [vmem:[#allocation2] sm:$0xff]
          %370 = vst [vmem:[#allocation1] ss:$2 sm:$0xff] %v368
          %v371 = vld.sshfl [vmem:[#allocation1] sm:$0xff pattern:$0x75316420]
          %v372 = vld.sshfl [vmem:[#allocation1 + $0x8] sm:$0xff pattern:$0x75316420]
          %v375 = vsel %vm276, %v371, 0.0
          %v376 = vsel %vm276, %v372, 0.0
          %v377 = vadd.f32 %v375, %v376
          %378 = vadd.xlane.f32.xlu0 %v377
          %v379 = vpop.xlane.xlu0 %378
          %vm380 = vcmask 3072
          %381 = vst.msk [vmem:[%s257] sm:$0xf] %vm380, %v379
          %v382 = vld [vmem:[#allocation3] sm:$0xff]
          %384 = vst [vmem:[#allocation1] ss:$2 sm:$0xff] %v382
          %v385 = vld.sshfl [vmem:[#allocation1] sm:$0xff pattern:$0x75316420]
          %v386 = vld.sshfl [vmem:[#allocation1 + $0x8] sm:$0xff pattern:$0x75316420]
          %v389 = vsel %vm276, %v385, 0.0
          %v390 = vsel %vm276, %v386, 0.0
          %v391 = vadd.f32 %v389, %v390
          %392 = vadd.xlane.f32.xlu0 %v391
          %v393 = vpop.xlane.xlu0 %392
          %394 = vst.msk [vmem:[%s261] sm:$0xf] %vm380, %v393
        $region44: #{tpu_custom_call.1} parent=27 // pred_fallthru
          _
        %p395 = scmp.lt.s32.totalorder %s25, 1
        %s396 = scalar_select %p395, %s25, 1
        %s397 = smul.addr %s396, 4
        %s398 = scalar_lea.vmem %s2, %s397
        %p399 = scmp.lt.s32.totalorder %s25, 1
        %s400 = scalar_select %p399, %s25, 1
        %s401 = smul.addr %s400, 4
        %s402 = scalar_lea.vmem %s3, %s401
        // Predicated region
        $region45: #{tpu_custom_call.1} parent=27 // pred_check
          %p403 = pneg %p107
        $region46: #{tpu_custom_call.1} parent=27 // pred_check_branch
          %405 = sbr.rel (%p403) target = $region48
        $region47: #{tpu_custom_call.1} parent=27 // pred_region
          _
        $region48: #{tpu_custom_call.1} parent=27 // pred_fallthru
          _
        // Predicated region
        $region49: #{tpu_custom_call.1} parent=27 // pred_check
          %p406 = pneg %p133
        $region50: #{tpu_custom_call.1} parent=27 // pred_check_branch
          %408 = sbr.rel (%p406) target = $region52
        $region51: #{tpu_custom_call.1} parent=27 // pred_region
          _
        $region52: #{tpu_custom_call.1} parent=27 // pred_fallthru
          _
      $region28: #{tpu_custom_call.1} parent=5 // pred_fallthru
        _
      %p409 = scmp.le.s32.totalorder 2, %s16
      // Predicated region
      $region53: #{tpu_custom_call.1} parent=5 // pred_check
        %p410 = pneg %p409
      $region54: #{tpu_custom_call.1} parent=5 // pred_check_branch
        %412 = sbr.rel (%p410) target = $region56
      $region55: #{tpu_custom_call.1} parent=5 // pred_region
        %s413 = ssub.s32 %s16, 2
        // Predicated region
        $region57: #{tpu_custom_call.1} parent=55 // pred_check
          %p414 = pneg %p113
        $region58: #{tpu_custom_call.1} parent=55 // pred_check_branch
          %416 = sbr.rel (%p414) target = $region60
        $region59: #{tpu_custom_call.1} parent=55 // pred_region
          %p417 = scmp.lt.s32.totalorder %s27, 1
          %s418 = scalar_select %p417, %s27, 1
          %s419 = smul.addr %s418, 4
          %s420 = scalar_lea.vmem %s2, %s419
        $region60: #{tpu_custom_call.1} parent=55 // pred_fallthru
          _
        // Predicated region
        $region61: #{tpu_custom_call.1} parent=55 // pred_check
          %p421 = pneg %p139
        $region62: #{tpu_custom_call.1} parent=55 // pred_check_branch
          %423 = sbr.rel (%p421) target = $region64
        $region63: #{tpu_custom_call.1} parent=55 // pred_region
          %p424 = scmp.lt.s32.totalorder %s27, 1
          %s425 = scalar_select %p424, %s27, 1
          %s426 = smul.addr %s425, 4
          %s427 = scalar_lea.vmem %s3, %s426
        $region64: #{tpu_custom_call.1} parent=55 // pred_fallthru
          _
      $region56: #{tpu_custom_call.1} parent=5 // pred_fallthru
        _
    $region6: #{tpu_custom_call.1} parent=1 // loop_footer
      %s20 = sadd.s32 1, %s16
    $region7: #{tpu_custom_call.1} parent=1 // loop_footer_branch
      %15 = sbr.rel target = $region3
    $region8: #{tpu_custom_call.1} parent=1 // loop_exit
      _
    %428 = vsyncpa [#allocation5], 1
    %s429 = scalar_lea.sflag [#allocation5], 1
    %430 = vsyncpa %s429, 1
    %431 = vsyncpa [#allocation7], 1
    %s432 = scalar_lea.sflag [#allocation7], 1
    %433 = vsyncpa %s432, 1

</llo_original>
